<compile_context>
chip_gen: v7x
topology: tpu7x:2x2x1
jax: 0.10.0
libtpu: 0.0.40
codegen_flags: <defaults>
</compile_context>

<pallas_src>
import math

import jax
import jax.numpy as jnp
from jax.experimental import pallas as pl
from jax.experimental.pallas import tpu as pltpu

LANE = 128


def _round_up(x, m):
    return ((x + m - 1) // m) * m


# ---------------------------------------------------------------------------
# Fused kernel: EmbeddingBag(mean) -> GRU cell (h0 == 0) -> Linear.
#   Inputs (VMEM):
#     text_col [Tp, 1] i32 (pad = -1), starts/ends [B,1] i32, inv_cnt [B,1] f32,
#     emb [Vp, E] bf16, w_ih [E, G3P] bf16, b_g [1, G3P] f32, b_hn [1, H] f32,
#     w_fc [H, CP] bf16, b_fc [1, CP] f32
#   Output: [B, CP] f32   (real logits in [:, :num_class])
# ---------------------------------------------------------------------------
def fused_embed_gru_fc_kernel(text_ref, starts_ref, ends_ref, inv_cnt_ref,
                              emb_ref, w_ih_ref, b_g_ref, b_hn_ref,
                              w_fc_ref, b_fc_ref, o_ref):
    B = o_ref.shape[0]
    T_pad = text_ref.shape[0]
    V_pad = emb_ref.shape[0]
    H = b_hn_ref.shape[1]

    # ---- EmbeddingBag, mode='mean', as two tiny MXU matmuls --------------
    # onehot[t, v] = 1 iff text[t] == v  (padding tokens are -1 -> all-zero row;
    # out-of-range ids also match nothing -> safe, contribute a zero vector).
    tok = text_ref[...]                                               # [Tp, 1] i32
    vocab_iota = jax.lax.broadcasted_iota(jnp.int32, (T_pad, V_pad), 1)
    onehot = (tok == vocab_iota).astype(jnp.float32)                  # [Tp, Vp]

    # member[b, t] = 1 iff offsets[b] <= t < offsets[b+1]
    t_iota = jax.lax.broadcasted_iota(jnp.int32, (B, T_pad), 1)
    member = ((t_iota >= starts_ref[...]) &
              (t_iota < ends_ref[...])).astype(jnp.float32)           # [B, Tp]

    # counts[b, v] = # tokens equal to v in bag b  (exact small integers).
    counts = jnp.dot(member.astype(jnp.bfloat16), onehot.astype(jnp.bfloat16),
                     preferred_element_type=jnp.float32)              # [B, Vp]
    pooled = jnp.dot(counts.astype(jnp.bfloat16), emb_ref[...],
                     preferred_element_type=jnp.float32) * inv_cnt_ref[...]  # [B, E] f32

    # ---- GRU cell, single step from h0 == 0 ------------------------------
    # Gates packed densely: lanes [0:H]=r, [H:2H]=z, [2H:3H]=n inside one 128-lane
    # block.  r/z biases already fold b_ih + b_hh (h0 == 0); only b_hn stays
    # separate (needed for the r * b_hn term).
    gi = jnp.dot(pooled.astype(jnp.bfloat16), w_ih_ref[...],
                 preferred_element_type=jnp.float32) + b_g_ref[...]   # [B, G3P]

    r = jax.nn.sigmoid(gi[:, 0:H])                                    # lane-rotates: XLU, idle here
    z = jax.nn.sigmoid(gi[:, H:2 * H])
    n = jnp.tanh(gi[:, 2 * H:3 * H] + r * b_hn_ref[...])
    h = (1.0 - z) * n                                                 # + z * h0, h0 == 0  -> [B, H]

    # ---- Classifier (lane-dense [B, CP] store) ----------------------------
    o_ref[...] = (jnp.dot(h.astype(jnp.bfloat16), w_fc_ref[...],
                          preferred_element_type=jnp.float32) + b_fc_ref[...])


# ---------------------------------------------------------------------------
# One-time parameter packing: pad / fold / cast into the kernel layout.
#   w_ih is expected as [E, 3H] (gate order r, z, n).
# ---------------------------------------------------------------------------
def prepare_params(emb_table, w_ih, b_ih, b_hh, w_fc, b_fc):
    V, E = emb_table.shape
    H, C = w_fc.shape
    G3 = 3 * H
    V_pad = _round_up(V, LANE)
    G3P = _round_up(G3, LANE)          # one 128-lane block holds all three gates
    CP = _round_up(C, LANE)

    emb_p = jnp.zeros((V_pad, E), jnp.bfloat16).at[:V, :].set(
        emb_table.astype(jnp.bfloat16))

    # Fold b_ih + b_hh for r and z; keep only the input-side bias for n.
    b_fold = jnp.concatenate([b_ih[:2 * H] + b_hh[:2 * H], b_ih[2 * H:]])

    w_ih_p = jnp.zeros((E, G3P), jnp.bfloat16).at[:, :G3].set(w_ih.astype(jnp.bfloat16))
    b_g_p = jnp.zeros((1, G3P), jnp.float32).at[0, :G3].set(b_fold)
    b_hn_p = b_hh[2 * H:].reshape(1, H).astype(jnp.float32)
    w_fc_p = jnp.zeros((H, CP), jnp.bfloat16).at[:, :C].set(w_fc.astype(jnp.bfloat16))
    b_fc_p = jnp.zeros((1, CP), jnp.float32).at[0, :C].set(b_fc)
    return emb_p, w_ih_p, b_g_p, b_hn_p, w_fc_p, b_fc_p


# ---------------------------------------------------------------------------
# Forward wrapper: O(B)+O(T) index prep, one pallas_call, a lane slice.
# ---------------------------------------------------------------------------
def gru_model_forward(text, offsets, params, *, num_class):
    emb_p, w_ih_p, b_g_p, b_hn_p, w_fc_p, b_fc_p = params
    B = offsets.shape[0]
    T = text.shape[0]
    T_pad = _round_up(T, 8)
    CP = w_fc_p.shape[1]

    text_col = jnp.full((T_pad, 1), -1, jnp.int32).at[:T, 0].set(text.astype(jnp.int32))
    offs = offsets.astype(jnp.int32)
    starts = offs.reshape(B, 1)
    ends = jnp.concatenate([offs[1:], jnp.array([T], jnp.int32)]).reshape(B, 1)
    inv_cnt = 1.0 / jnp.maximum((ends - starts).astype(jnp.float32), 1.0)   # [B, 1]

    def full_spec(shape):
        return pl.BlockSpec(shape, lambda i: (0,) * len(shape))

    out = pl.pallas_call(
        fused_embed_gru_fc_kernel,
        out_shape=jax.ShapeDtypeStruct((B, CP), jnp.float32),
        grid=(1,),
        in_specs=[full_spec(text_col.shape),
                  full_spec((B, 1)), full_spec((B, 1)), full_spec((B, 1)),
                  full_spec(emb_p.shape), full_spec(w_ih_p.shape),
                  full_spec(b_g_p.shape), full_spec(b_hn_p.shape),
                  full_spec(w_fc_p.shape), full_spec(b_fc_p.shape)],
        out_specs=full_spec((B, CP)),
        compiler_params=pltpu.CompilerParams(
            dimension_semantics=("arbitrary",),
            vmem_limit_bytes=32 * 1024 * 1024),
    )(text_col, starts, ends, inv_cnt,
      emb_p, w_ih_p, b_g_p, b_hn_p, w_fc_p, b_fc_p)

    return out[:, :num_class]


# ---------------------------------------------------------------------------
# Pure-JAX f32 reference of the full forward (for verification).
# ---------------------------------------------------------------------------
def reference_forward(emb_table, w_ih, b_ih, b_hh, w_fc, b_fc, text, offsets):
    H, _ = w_fc.shape
    T = text.shape[0]
    B = offsets.shape[0]
    emb = emb_table[text]                                              # [T, E]
    seg = jnp.searchsorted(offsets, jnp.arange(T), side="right") - 1
    sums = jax.ops.segment_sum(emb, seg, num_segments=B)
    counts = jax.ops.segment_sum(jnp.ones((T,), jnp.float32), seg, num_segments=B)
    x = sums / jnp.maximum(counts, 1.0)[:, None]                       # [B, E]
    gi = x @ w_ih                                                      # [B, 3H]
    r = jax.nn.sigmoid(gi[:, :H] + b_ih[:H] + b_hh[:H])
    z = jax.nn.sigmoid(gi[:, H:2 * H] + b_ih[H:2 * H] + b_hh[H:2 * H])
    n = jnp.tanh(gi[:, 2 * H:] + b_ih[2 * H:] + r * b_hh[2 * H:])
    h = (1.0 - z) * n
    return h @ w_fc + b_fc


if __name__ == "__main__":
    # Small, module-consistent sizes.
    vocab_size, embed_dim, hidden_dim, num_class = 100, 32, 32, 4
    batch = 8
    tokens_per_bag = 4
    total_tokens = batch * tokens_per_bag

    key = jax.random.PRNGKey(0)
    k_emb, k_wih, k_bih, k_bhh, k_fc, k_txt = jax.random.split(key, 6)

    initrange = 0.5
    inv_sqrt_h = 1.0 / math.sqrt(hidden_dim)

    # Parameters (deterministic, mirroring the PyTorch __init__ shapes/inits).
    emb_table = jax.random.uniform(k_emb, (vocab_size, embed_dim),
                                   jnp.float32, -initrange, initrange)
    # GRU params, PyTorch default init U(-1/sqrt(H), 1/sqrt(H)); W_ih stored [E, 3H].
    w_ih = jax.random.uniform(k_wih, (embed_dim, 3 * hidden_dim),
                              jnp.float32, -inv_sqrt_h, inv_sqrt_h)
    b_ih = jax.random.uniform(k_bih, (3 * hidden_dim,),
                              jnp.float32, -inv_sqrt_h, inv_sqrt_h)
    b_hh = jax.random.uniform(k_bhh, (3 * hidden_dim,),
                              jnp.float32, -inv_sqrt_h, inv_sqrt_h)
    # FC layer: weight U(-0.5, 0.5), bias zero.
    w_fc = jax.random.uniform(k_fc, (hidden_dim, num_class),
                              jnp.float32, -initrange, initrange)
    b_fc = jnp.zeros((num_class,), jnp.float32)

    # Inputs: flat token indices + bag offsets (EmbeddingBag convention).
    text = jax.random.randint(k_txt, (total_tokens,), 0, vocab_size, jnp.int32)
    offsets = jnp.arange(batch, dtype=jnp.int32) * tokens_per_bag

    # Forward pass: one fused Pallas kernel.
    params = prepare_params(emb_table, w_ih, b_ih, b_hh, w_fc, b_fc)
    out = gru_model_forward(text, offsets, params, num_class=num_class)
    out = jax.block_until_ready(out)

    # Sanity check against the pure-f32 JAX reference.  Weights inside the kernel are
    # bf16 (per perf review), so tolerance accounts for ~0.2% weight rounding.
    ref = reference_forward(emb_table, w_ih, b_ih, b_hh, w_fc, b_fc, text, offsets)
    assert out.shape == (batch, num_class)
    max_err = float(jnp.max(jnp.abs(out - ref)))
    assert jnp.allclose(out, ref, atol=3e-2, rtol=3e-2), \
        f"mismatch vs reference (max abs err {max_err})"

    print("KERNEL_OK")
</pallas_src>

<mosaic_0001>
module attributes {stable_mosaic.version = 11 : i64} {
  func.func @fused_embed_gru_fc_kernel(%arg0: i32, %arg1: memref<32x1xi32, #tpu.memory_space<vmem>>, %arg2: memref<8x1xi32, #tpu.memory_space<vmem>>, %arg3: memref<8x1xi32, #tpu.memory_space<vmem>>, %arg4: memref<8x1xf32, #tpu.memory_space<vmem>>, %arg5: memref<128x32xbf16, #tpu.memory_space<vmem>>, %arg6: memref<32x128xbf16, #tpu.memory_space<vmem>>, %arg7: memref<1x128xf32, #tpu.memory_space<vmem>>, %arg8: memref<1x32xf32, #tpu.memory_space<vmem>>, %arg9: memref<32x128xbf16, #tpu.memory_space<vmem>>, %arg10: memref<1x128xf32, #tpu.memory_space<vmem>>, %arg11: memref<8x128xf32, #tpu.memory_space<vmem>>) attributes {dimension_semantics = [#tpu.dimension_semantics<arbitrary>], iteration_bounds = array<i64: 1>, scalar_prefetch = 0 : i64, scratch_operands = 0 : i64, tpu.core_type = #tpu.core_type<tc>, window_params = [{pipeline_mode = #tpu.pipeline_mode<synchronous>, transform_indices = @transform_0, window_bounds = array<i64: 32, 1>}, {pipeline_mode = #tpu.pipeline_mode<synchronous>, transform_indices = @transform_1, window_bounds = array<i64: 8, 1>}, {pipeline_mode = #tpu.pipeline_mode<synchronous>, transform_indices = @transform_2, window_bounds = array<i64: 8, 1>}, {pipeline_mode = #tpu.pipeline_mode<synchronous>, transform_indices = @transform_3, window_bounds = array<i64: 8, 1>}, {pipeline_mode = #tpu.pipeline_mode<synchronous>, transform_indices = @transform_4, window_bounds = array<i64: 128, 32>}, {pipeline_mode = #tpu.pipeline_mode<synchronous>, transform_indices = @transform_5, window_bounds = array<i64: 32, 128>}, {pipeline_mode = #tpu.pipeline_mode<synchronous>, transform_indices = @transform_6, window_bounds = array<i64: 1, 128>}, {pipeline_mode = #tpu.pipeline_mode<synchronous>, transform_indices = @transform_7, window_bounds = array<i64: 1, 32>}, {pipeline_mode = #tpu.pipeline_mode<synchronous>, transform_indices = @transform_8, window_bounds = array<i64: 32, 128>}, {pipeline_mode = #tpu.pipeline_mode<synchronous>, transform_indices = @transform_9, window_bounds = array<i64: 1, 128>}, {pipeline_mode = #tpu.pipeline_mode<synchronous>, transform_indices = @transform_10, window_bounds = array<i64: 8, 128>}]} {
    %c0 = arith.constant 0 : index
    %c0_0 = arith.constant 0 : index
    %0 = vector.load %arg1[%c0, %c0_0] : memref<32x1xi32, #tpu.memory_space<vmem>>, vector<32x1xi32>
    %1 = tpu.iota {dimensions = array<i32: 1>} : vector<32x128xi32>
    %2 = vector.broadcast %0 : vector<32x1xi32> to vector<32x128xi32>
    %3 = arith.cmpi eq, %2, %1 : vector<32x128xi32>
    %4 = arith.extui %3 : vector<32x128xi1> to vector<32x128xi32>
    %5 = arith.sitofp %4 : vector<32x128xi32> to vector<32x128xf32>
    %6 = tpu.iota {dimensions = array<i32: 1>} : vector<8x32xi32>
    %c0_1 = arith.constant 0 : index
    %c0_2 = arith.constant 0 : index
    %7 = vector.load %arg2[%c0_1, %c0_2] : memref<8x1xi32, #tpu.memory_space<vmem>>, vector<8x1xi32>
    %8 = vector.broadcast %7 : vector<8x1xi32> to vector<8x32xi32>
    %9 = arith.cmpi sge, %6, %8 : vector<8x32xi32>
    %c0_3 = arith.constant 0 : index
    %c0_4 = arith.constant 0 : index
    %10 = vector.load %arg3[%c0_3, %c0_4] : memref<8x1xi32, #tpu.memory_space<vmem>>, vector<8x1xi32>
    %11 = vector.broadcast %10 : vector<8x1xi32> to vector<8x32xi32>
    %12 = arith.cmpi slt, %6, %11 : vector<8x32xi32>
    %13 = arith.andi %9, %12 : vector<8x32xi1>
    %14 = arith.extui %13 : vector<8x32xi1> to vector<8x32xi32>
    %15 = arith.sitofp %14 : vector<8x32xi32> to vector<8x32xf32>
    %16 = arith.truncf %15 : vector<8x32xf32> to vector<8x32xbf16>
    %17 = arith.truncf %5 : vector<32x128xf32> to vector<32x128xbf16>
    %cst = arith.constant dense<0.000000e+00> : vector<8x128xf32>
    %18 = tpu.matmul %16, %17, %cst {dimension_numbers = #tpu.dot_dimension_numbers<[1], [0], [0], [1], [0, 0, 1, 1], [], []>} : vector<8x32xbf16>, vector<32x128xbf16>, vector<8x128xf32> -> vector<8x128xf32>
    %19 = arith.truncf %18 : vector<8x128xf32> to vector<8x128xbf16>
    %c0_5 = arith.constant 0 : index
    %c0_6 = arith.constant 0 : index
    %20 = vector.load %arg5[%c0_5, %c0_6] : memref<128x32xbf16, #tpu.memory_space<vmem>>, vector<128x32xbf16>
    %cst_7 = arith.constant dense<0.000000e+00> : vector<8x32xf32>
    %21 = tpu.matmul %19, %20, %cst_7 {dimension_numbers = #tpu.dot_dimension_numbers<[1], [0], [0], [1], [0, 0, 1, 1], [], []>} : vector<8x128xbf16>, vector<128x32xbf16>, vector<8x32xf32> -> vector<8x32xf32>
    %c0_8 = arith.constant 0 : index
    %c0_9 = arith.constant 0 : index
    %22 = vector.load %arg4[%c0_8, %c0_9] : memref<8x1xf32, #tpu.memory_space<vmem>>, vector<8x1xf32>
    %23 = vector.broadcast %22 : vector<8x1xf32> to vector<8x32xf32>
    %24 = arith.mulf %21, %23 : vector<8x32xf32>
    %25 = arith.truncf %24 : vector<8x32xf32> to vector<8x32xbf16>
    %c0_10 = arith.constant 0 : index
    %c0_11 = arith.constant 0 : index
    %26 = vector.load %arg6[%c0_10, %c0_11] : memref<32x128xbf16, #tpu.memory_space<vmem>>, vector<32x128xbf16>
    %cst_12 = arith.constant dense<0.000000e+00> : vector<8x128xf32>
    %27 = tpu.matmul %25, %26, %cst_12 {dimension_numbers = #tpu.dot_dimension_numbers<[1], [0], [0], [1], [0, 0, 1, 1], [], []>} : vector<8x32xbf16>, vector<32x128xbf16>, vector<8x128xf32> -> vector<8x128xf32>
    %c0_13 = arith.constant 0 : index
    %c0_14 = arith.constant 0 : index
    %28 = vector.load %arg7[%c0_13, %c0_14] : memref<1x128xf32, #tpu.memory_space<vmem>>, vector<1x128xf32>
    %29 = vector.broadcast %28 : vector<1x128xf32> to vector<8x128xf32>
    %30 = arith.addf %27, %29 : vector<8x128xf32>
    %31 = vector.extract_strided_slice %30 {offsets = [0, 0], sizes = [8, 32], strides = [1, 1]} : vector<8x128xf32> to vector<8x32xf32>
    %32 = arith.negf %31 : vector<8x32xf32>
    %33 = math.exp %32 : vector<8x32xf32>
    %cst_15 = arith.constant 1.000000e+00 : f32
    %34 = vector.broadcast %cst_15 : f32 to vector<8x32xf32>
    %35 = arith.addf %34, %33 : vector<8x32xf32>
    %36 = arith.divf %34, %35 : vector<8x32xf32>
    %37 = vector.extract_strided_slice %30 {offsets = [0, 32], sizes = [8, 32], strides = [1, 1]} : vector<8x128xf32> to vector<8x32xf32>
    %38 = arith.negf %37 : vector<8x32xf32>
    %39 = math.exp %38 : vector<8x32xf32>
    %cst_16 = arith.constant 1.000000e+00 : f32
    %40 = vector.broadcast %cst_16 : f32 to vector<8x32xf32>
    %41 = arith.addf %40, %39 : vector<8x32xf32>
    %42 = arith.divf %40, %41 : vector<8x32xf32>
    %43 = vector.extract_strided_slice %30 {offsets = [0, 64], sizes = [8, 32], strides = [1, 1]} : vector<8x128xf32> to vector<8x32xf32>
    %c0_17 = arith.constant 0 : index
    %c0_18 = arith.constant 0 : index
    %44 = vector.load %arg8[%c0_17, %c0_18] : memref<1x32xf32, #tpu.memory_space<vmem>>, vector<1x32xf32>
    %45 = vector.broadcast %44 : vector<1x32xf32> to vector<8x32xf32>
    %46 = arith.mulf %36, %45 : vector<8x32xf32>
    %47 = arith.addf %43, %46 : vector<8x32xf32>
    %48 = math.tanh %47 : vector<8x32xf32>
    %cst_19 = arith.constant 1.000000e+00 : f32
    %49 = vector.broadcast %cst_19 : f32 to vector<8x32xf32>
    %50 = arith.subf %49, %42 : vector<8x32xf32>
    %51 = arith.mulf %50, %48 : vector<8x32xf32>
    %52 = arith.truncf %51 : vector<8x32xf32> to vector<8x32xbf16>
    %c0_20 = arith.constant 0 : index
    %c0_21 = arith.constant 0 : index
    %53 = vector.load %arg9[%c0_20, %c0_21] : memref<32x128xbf16, #tpu.memory_space<vmem>>, vector<32x128xbf16>
    %cst_22 = arith.constant dense<0.000000e+00> : vector<8x128xf32>
    %54 = tpu.matmul %52, %53, %cst_22 {dimension_numbers = #tpu.dot_dimension_numbers<[1], [0], [0], [1], [0, 0, 1, 1], [], []>} : vector<8x32xbf16>, vector<32x128xbf16>, vector<8x128xf32> -> vector<8x128xf32>
    %c0_23 = arith.constant 0 : index
    %c0_24 = arith.constant 0 : index
    %55 = vector.load %arg10[%c0_23, %c0_24] : memref<1x128xf32, #tpu.memory_space<vmem>>, vector<1x128xf32>
    %56 = vector.broadcast %55 : vector<1x128xf32> to vector<8x128xf32>
    %57 = arith.addf %54, %56 : vector<8x128xf32>
    %c0_25 = arith.constant 0 : index
    %c0_26 = arith.constant 0 : index
    %58 = vector.load %arg11[%c0_25, %c0_26] : memref<8x128xf32, #tpu.memory_space<vmem>>, vector<8x128xf32>
    tpu.vector_store %arg11[%c0_25, %c0_26], %57 {strides = array<i32>} : memref<8x128xf32, #tpu.memory_space<vmem>>, vector<8x128xf32>,
    return
  }
  func.func @transform_0(%arg0: i32) -> (i32, i32) {
    %c0_i32 = arith.constant 0 : i32
    %c0_i32_0 = arith.constant 0 : i32
    %c0_i32_1 = arith.constant 0 : i32
    return %c0_i32, %c0_i32_0 : i32, i32
  }
  func.func @transform_1(%arg0: i32) -> (i32, i32) {
    %c0_i32 = arith.constant 0 : i32
    %c0_i32_0 = arith.constant 0 : i32
    %c0_i32_1 = arith.constant 0 : i32
    return %c0_i32, %c0_i32_0 : i32, i32
  }
  func.func @transform_2(%arg0: i32) -> (i32, i32) {
    %c0_i32 = arith.constant 0 : i32
    %c0_i32_0 = arith.constant 0 : i32
    %c0_i32_1 = arith.constant 0 : i32
    return %c0_i32, %c0_i32_0 : i32, i32
  }
  func.func @transform_3(%arg0: i32) -> (i32, i32) {
    %c0_i32 = arith.constant 0 : i32
    %c0_i32_0 = arith.constant 0 : i32
    %c0_i32_1 = arith.constant 0 : i32
    return %c0_i32, %c0_i32_0 : i32, i32
  }
  func.func @transform_4(%arg0: i32) -> (i32, i32) {
    %c0_i32 = arith.constant 0 : i32
    %c0_i32_0 = arith.constant 0 : i32
    %c0_i32_1 = arith.constant 0 : i32
    return %c0_i32, %c0_i32_0 : i32, i32
  }
  func.func @transform_5(%arg0: i32) -> (i32, i32) {
    %c0_i32 = arith.constant 0 : i32
    %c0_i32_0 = arith.constant 0 : i32
    %c0_i32_1 = arith.constant 0 : i32
    return %c0_i32, %c0_i32_0 : i32, i32
  }
  func.func @transform_6(%arg0: i32) -> (i32, i32) {
    %c0_i32 = arith.constant 0 : i32
    %c0_i32_0 = arith.constant 0 : i32
    %c0_i32_1 = arith.constant 0 : i32
    return %c0_i32, %c0_i32_0 : i32, i32
  }
  func.func @transform_7(%arg0: i32) -> (i32, i32) {
    %c0_i32 = arith.constant 0 : i32
    %c0_i32_0 = arith.constant 0 : i32
    %c0_i32_1 = arith.constant 0 : i32
    return %c0_i32, %c0_i32_0 : i32, i32
  }
  func.func @transform_8(%arg0: i32) -> (i32, i32) {
    %c0_i32 = arith.constant 0 : i32
    %c0_i32_0 = arith.constant 0 : i32
    %c0_i32_1 = arith.constant 0 : i32
    return %c0_i32, %c0_i32_0 : i32, i32
  }
  func.func @transform_9(%arg0: i32) -> (i32, i32) {
    %c0_i32 = arith.constant 0 : i32
    %c0_i32_0 = arith.constant 0 : i32
    %c0_i32_1 = arith.constant 0 : i32
    return %c0_i32, %c0_i32_0 : i32, i32
  }
  func.func @transform_10(%arg0: i32) -> (i32, i32) {
    %c0_i32 = arith.constant 0 : i32
    %c0_i32_0 = arith.constant 0 : i32
    %c0_i32_1 = arith.constant 0 : i32
    return %c0_i32, %c0_i32_0 : i32, i32
  }
}

</mosaic_0001>

<llo_original>
// kernel: tpu_custom_call.1
$region0: #{tpu_custom_call.1}
  #allocation0 [shape = 'u32[]', space=smem, size = 0x4, offset = 0x4, fixed_abs, tag = 'smem constant byte address 0x4 - core index']
  #allocation1 [shape = 'u32[144,128]{1,0:T(1,128)}', space=vmem, size = 0x12000, scoped, tag = 'internal scratch']
  %s0 = inlined_call_operand.vmem [shape: s32[32,1], index: 0, kind: input, shape index: {}]
  %s1 = inlined_call_operand.vmem [shape: s32[8,1], index: 1, kind: input, shape index: {}]
  %s2 = inlined_call_operand.vmem [shape: s32[8,1], index: 2, kind: input, shape index: {}]
  %s3 = inlined_call_operand.vmem [shape: f32[8,1], index: 3, kind: input, shape index: {}]
  %s4 = inlined_call_operand.vmem [shape: bf16[128,32], index: 4, kind: input, shape index: {}]
  %s5 = inlined_call_operand.vmem [shape: bf16[32,128], index: 5, kind: input, shape index: {}]
  %s6 = inlined_call_operand.vmem [shape: f32[1,128], index: 6, kind: input, shape index: {}]
  %s7 = inlined_call_operand.vmem [shape: f32[1,32], index: 7, kind: input, shape index: {}]
  %s8 = inlined_call_operand.vmem [shape: bf16[32,128], index: 8, kind: input, shape index: {}]
  %s9 = inlined_call_operand.vmem [shape: f32[1,128], index: 9, kind: input, shape index: {}]
  %s10 = inlined_call_operand.hbm [shape: f32[8,128], index: 10, kind: output, shape index: {}]
  %s11 = sld [smem:[#allocation0]]
  $region50: #{tpu_custom_call.1} parent=0
    _
  %s13 = ssub.s32 1, %s11
  %s14 = scalar_select 0, %s13, %s11
  $region1: #{tpu_custom_call.1} parent=0
    #allocation2 [shape = 'u8[4096]{0}', space=vmem, size = 0x1000, scoped, tag = 'output window, operand 0, single buffered']
    #allocation3 [shape = 's32[1]{0}', space=sflag, size = 0x4, scoped, tag = 'scoped memory for tpu_custom_call.1']
    %15 = vsyncpa [#allocation3], 0
    // Predicated region
    $region2: #{tpu_custom_call.1} parent=1 // pred_check
      _
    $region3: #{tpu_custom_call.1} parent=1 // pred_check_branch
      %17 = sbr.rel (0) target = $region5
    $region4: #{tpu_custom_call.1} parent=1 // pred_region
      _
    $region5: #{tpu_custom_call.1} parent=1 // pred_fallthru
      _
    // Predicated region
    $region6: #{tpu_custom_call.1} parent=1 // pred_check
      _
    $region7: #{tpu_custom_call.1} parent=1 // pred_check_branch
      %19 = sbr.rel (0) target = $region9
    $region8: #{tpu_custom_call.1} parent=1 // pred_region
      _
    $region9: #{tpu_custom_call.1} parent=1 // pred_fallthru
      _
    // Predicated region
    $region10: #{tpu_custom_call.1} parent=1 // pred_check
      _
    $region11: #{tpu_custom_call.1} parent=1 // pred_check_branch
      %21 = sbr.rel (0) target = $region13
    $region12: #{tpu_custom_call.1} parent=1 // pred_region
      _
    $region13: #{tpu_custom_call.1} parent=1 // pred_fallthru
      _
    // Predicated region
    $region14: #{tpu_custom_call.1} parent=1 // pred_check
      _
    $region15: #{tpu_custom_call.1} parent=1 // pred_check_branch
      %23 = sbr.rel (0) target = $region17
    $region16: #{tpu_custom_call.1} parent=1 // pred_region
      _
    $region17: #{tpu_custom_call.1} parent=1 // pred_fallthru
      _
    // Predicated region
    $region18: #{tpu_custom_call.1} parent=1 // pred_check
      _
    $region19: #{tpu_custom_call.1} parent=1 // pred_check_branch
      %25 = sbr.rel (0) target = $region21
    $region20: #{tpu_custom_call.1} parent=1 // pred_region
      _
    $region21: #{tpu_custom_call.1} parent=1 // pred_fallthru
      _
    // Predicated region
    $region22: #{tpu_custom_call.1} parent=1 // pred_check
      _
    $region23: #{tpu_custom_call.1} parent=1 // pred_check_branch
      %27 = sbr.rel (0) target = $region25
    $region24: #{tpu_custom_call.1} parent=1 // pred_region
      _
    $region25: #{tpu_custom_call.1} parent=1 // pred_fallthru
      _
    // Predicated region
    $region26: #{tpu_custom_call.1} parent=1 // pred_check
      _
    $region27: #{tpu_custom_call.1} parent=1 // pred_check_branch
      %29 = sbr.rel (0) target = $region29
    $region28: #{tpu_custom_call.1} parent=1 // pred_region
      _
    $region29: #{tpu_custom_call.1} parent=1 // pred_fallthru
      _
    // Predicated region
    $region30: #{tpu_custom_call.1} parent=1 // pred_check
      _
    $region31: #{tpu_custom_call.1} parent=1 // pred_check_branch
      %31 = sbr.rel (0) target = $region33
    $region32: #{tpu_custom_call.1} parent=1 // pred_region
      _
    $region33: #{tpu_custom_call.1} parent=1 // pred_fallthru
      _
    // Predicated region
    $region34: #{tpu_custom_call.1} parent=1 // pred_check
      _
    $region35: #{tpu_custom_call.1} parent=1 // pred_check_branch
      %33 = sbr.rel (0) target = $region37
    $region36: #{tpu_custom_call.1} parent=1 // pred_region
      _
    $region37: #{tpu_custom_call.1} parent=1 // pred_fallthru
      _
    // Predicated region
    $region38: #{tpu_custom_call.1} parent=1 // pred_check
      _
    $region39: #{tpu_custom_call.1} parent=1 // pred_check_branch
      %35 = sbr.rel (0) target = $region41
    $region40: #{tpu_custom_call.1} parent=1 // pred_region
      _
    $region41: #{tpu_custom_call.1} parent=1 // pred_fallthru
      _
    %v37 = vld [vmem:[%s0] sm:$0xff]
    %v38 = vld [vmem:[%s0 + $0x8] sm:$0xff]
    %v39 = vld [vmem:[%s0 + $0x10] sm:$0xff]
    %v40 = vld [vmem:[%s0 + $0x18] sm:$0xff]
    %v41 = vlaneseq
    %v42 = vand.u32 %v41, 127
    %43 = vset.pattern.permute.xlu0 0
    %44 = vperm.xlu0 %43, %v37
    %v45 = vpop.permute.xlu0 %44
    %46 = vset.pattern.permute.xlu0 0
    %47 = vperm.xlu0 %46, %v38
    %v48 = vpop.permute.xlu0 %47
    %49 = vset.pattern.permute.xlu0 0
    %50 = vperm.xlu0 %49, %v39
    %v51 = vpop.permute.xlu0 %50
    %52 = vset.pattern.permute.xlu0 0
    %53 = vperm.xlu0 %52, %v40
    %v54 = vpop.permute.xlu0 %53
    %vm55 = vcmp.eq.s32.totalorder %v45, %v42
    %vm56 = vcmp.eq.s32.totalorder %v48, %v42
    %vm57 = vcmp.eq.s32.totalorder %v51, %v42
    %vm58 = vcmp.eq.s32.totalorder %v54, %v42
    %v59 = vld [vmem:[%s1] sm:$0xff]
    %60 = vset.pattern.permute.xlu0 0
    %61 = vperm.xlu0 %60, %v59
    %v62 = vpop.permute.xlu0 %61
    %vm63 = vcmp.ge.s32.totalorder %v42, %v62
    %v64 = vld [vmem:[%s2] sm:$0xff]
    %65 = vset.pattern.permute.xlu0 0
    %66 = vperm.xlu0 %65, %v64
    %v67 = vpop.permute.xlu0 %66
    %vm68 = vcmp.lt.s32.totalorder %v42, %v67
    %vm69 = vmand %vm63, %vm68
    %v70 = vsel %vm69, 1, 0
    %v71 = vcvt.s32.f32 %v70
    %v72 = vpack.c.bf16 %v71, %v71
    %v73 = vsel %vm55, 1, 0
    %v74 = vsel %vm56, 1, 0
    %v75 = vsel %vm57, 1, 0
    %v76 = vsel %vm58, 1, 0
    %v77 = vcvt.s32.f32 %v73
    %v78 = vcvt.s32.f32 %v74
    %v79 = vcvt.s32.f32 %v75
    %v80 = vcvt.s32.f32 %v76
    %v81 = vpack.c.bf16 %v78, %v77
    %v82 = vpack.c.bf16 %v80, %v79
    %vm83 = vcmask 261120
    %v85 = vsel %vm83, %v72, 0
    %87 = vmatprep.subr.bf16.mxu0 0
    %88 = vmatpush1.bf16.msra.mxu0 %v81
    %89 = vmatprep.subr.bf16.mxu0 0
    %90 = vmatpush1.bf16.msra.mxu0 %v82
    %91 = vmatprep.subr.bf16.mxu0 0
    %92 = vmatpush1.bf16.msra.mxu0 0
    %93 = vmatprep.subr.bf16.mxu0 0
    %94 = vmatpush1.bf16.msra.mxu0 0
    %95 = vmatprep.subr.bf16.mxu0 0
    %96 = vmatpush1.bf16.msra.mxu0 0
    %97 = vmatprep.subr.bf16.mxu0 0
    %98 = vmatpush1.bf16.msra.mxu0 0
    %99 = vmatprep.subr.bf16.mxu0 0
    %100 = vmatpush1.bf16.msra.mxu0 0
    %101 = vmatprep.subr.bf16.mxu0 0
    %102 = vmatpush1.bf16.msra.mxu0 0
    %103 = vmatprep.subr.bf16.mxu0 0
    %104 = vmatpush1.bf16.msra.mxu0 0
    %105 = vmatprep.subr.bf16.mxu0 0
    %106 = vmatpush1.bf16.msra.mxu0 0
    %107 = vmatprep.subr.bf16.mxu0 0
    %108 = vmatpush1.bf16.msra.mxu0 0
    %109 = vmatprep.subr.bf16.mxu0 0
    %110 = vmatpush1.bf16.msra.mxu0 0
    %111 = vmatprep.subr.bf16.mxu0 0
    %112 = vmatpush1.bf16.msra.mxu0 0
    %113 = vmatprep.subr.bf16.mxu0 0
    %114 = vmatpush1.bf16.msra.mxu0 0
    %115 = vmatprep.subr.bf16.mxu0 0
    %116 = vmatpush1.bf16.msra.mxu0 0
    %117 = vmatprep.subr.bf16.mxu0 0
    %118 = vmatpush1.bf16.msra.mxu0 0
    %119 = vmatprep.mubr.bf16.mxu0 0
    %120 = vmatmul.mubr.bf16.gmra.mrb[0].mxu0 %v85
    %v121 = vpop.f32.mrb[0].mxu0
    %v122 = vadd.f32 0.0, %v121
    %v123 = vpop.f32.mrb[0].mxu0
    %v124 = vpop.f32.mrb[0].mxu0
    %v125 = vpop.f32.mrb[0].mxu0
    %126 = vdwg.mxu0
    %v127 = vpack.c.bf16 %v122, %v122
    %v128 = vld [vmem:[%s4] sm:$0xf]
    %v129 = vld [vmem:[%s4 + $0x4] sm:$0xf]
    %v130 = vld [vmem:[%s4 + $0x8] sm:$0xf]
    %v131 = vld [vmem:[%s4 + $0xc] sm:$0xf]
    %v132 = vld [vmem:[%s4 + $0x10] sm:$0xf]
    %v133 = vld [vmem:[%s4 + $0x14] sm:$0xf]
    %v134 = vld [vmem:[%s4 + $0x18] sm:$0xf]
    %v135 = vld [vmem:[%s4 + $0x1c] sm:$0xf]
    %v136 = vld [vmem:[%s4 + $0x20] sm:$0xf]
    %v137 = vld [vmem:[%s4 + $0x24] sm:$0xf]
    %v138 = vld [vmem:[%s4 + $0x28] sm:$0xf]
    %v139 = vld [vmem:[%s4 + $0x2c] sm:$0xf]
    %v140 = vld [vmem:[%s4 + $0x30] sm:$0xf]
    %v141 = vld [vmem:[%s4 + $0x34] sm:$0xf]
    %v142 = vld [vmem:[%s4 + $0x38] sm:$0xf]
    %v143 = vld [vmem:[%s4 + $0x3c] sm:$0xf]
    %v160 = vunpack.c.l.b16 %v128
    %v161 = vunpack.c.l.b16 %v129
    %v162 = vunpack.c.l.b16 %v130
    %v163 = vunpack.c.l.b16 %v131
    %v164 = vunpack.c.l.b16 %v132
    %v165 = vunpack.c.l.b16 %v133
    %v166 = vunpack.c.l.b16 %v134
    %v167 = vunpack.c.l.b16 %v135
    %v168 = vunpack.c.l.b16 %v136
    %v169 = vunpack.c.l.b16 %v137
    %v170 = vunpack.c.l.b16 %v138
    %v171 = vunpack.c.l.b16 %v139
    %v172 = vunpack.c.l.b16 %v140
    %v173 = vunpack.c.l.b16 %v141
    %v174 = vunpack.c.l.b16 %v142
    %v175 = vunpack.c.l.b16 %v143
    %v176 = vpack.c.b16 %v161, %v160
    %v177 = vpack.c.b16 %v163, %v162
    %v178 = vpack.c.b16 %v165, %v164
    %v179 = vpack.c.b16 %v167, %v166
    %v180 = vpack.c.b16 %v169, %v168
    %v181 = vpack.c.b16 %v171, %v170
    %v182 = vpack.c.b16 %v173, %v172
    %v183 = vpack.c.b16 %v175, %v174
    %192 = vmatprep.subr.bf16.mxu0 0
    %193 = vmatpush1.bf16.msra.mxu0 %v176
    %194 = vmatprep.subr.bf16.mxu0 0
    %195 = vmatpush1.bf16.msra.mxu0 %v177
    %196 = vmatprep.subr.bf16.mxu0 0
    %197 = vmatpush1.bf16.msra.mxu0 %v178
    %198 = vmatprep.subr.bf16.mxu0 0
    %199 = vmatpush1.bf16.msra.mxu0 %v179
    %200 = vmatprep.subr.bf16.mxu0 0
    %201 = vmatpush1.bf16.msra.mxu0 %v180
    %202 = vmatprep.subr.bf16.mxu0 0
    %203 = vmatpush1.bf16.msra.mxu0 %v181
    %204 = vmatprep.subr.bf16.mxu0 0
    %205 = vmatpush1.bf16.msra.mxu0 %v182
    %206 = vmatprep.subr.bf16.mxu0 0
    %207 = vmatpush1.bf16.msra.mxu0 %v183
    %208 = vmatprep.subr.bf16.mxu0 0
    %209 = vmatpush1.bf16.msra.mxu0 0
    %210 = vmatprep.subr.bf16.mxu0 0
    %211 = vmatpush1.bf16.msra.mxu0 0
    %212 = vmatprep.subr.bf16.mxu0 0
    %213 = vmatpush1.bf16.msra.mxu0 0
    %214 = vmatprep.subr.bf16.mxu0 0
    %215 = vmatpush1.bf16.msra.mxu0 0
    %216 = vmatprep.subr.bf16.mxu0 0
    %217 = vmatpush1.bf16.msra.mxu0 0
    %218 = vmatprep.subr.bf16.mxu0 0
    %219 = vmatpush1.bf16.msra.mxu0 0
    %220 = vmatprep.subr.bf16.mxu0 0
    %221 = vmatpush1.bf16.msra.mxu0 0
    %222 = vmatprep.subr.bf16.mxu0 0
    %223 = vmatpush1.bf16.msra.mxu0 0
    %224 = vmatprep.mubr.bf16.mxu0 0
    %225 = vmatmul.mubr.bf16.gmra.mrb[0].mxu0 %v127
    %v226 = vpop.f32.mrb[0].mxu0
    %v227 = vadd.f32 0.0, %v226
    %v228 = vpop.f32.mrb[0].mxu0
    %v229 = vpop.f32.mrb[0].mxu0
    %v230 = vpop.f32.mrb[0].mxu0
    %231 = vdwg.mxu0
    %v232 = vld [vmem:[%s3] sm:$0xff]
    %234 = vset.pattern.permute.xlu0 0
    %235 = vperm.xlu0 %234, %v232
    %v236 = vpop.permute.xlu0 %235
    %v238 = vmul.f32 %v227, %v236
    %v239 = vpack.c.bf16 %v238, %v238
    %v240 = vld [vmem:[%s5] sm:$0xf]
    %v241 = vld [vmem:[%s5 + $0x4] sm:$0xf]
    %v242 = vld [vmem:[%s5 + $0x8] sm:$0xf]
    %v243 = vld [vmem:[%s5 + $0xc] sm:$0xf]
    %v244 = vld [vmem:[%s6] sm:$0x1]
    %v246 = vlaneseq
    %v247 = vshrl.u32 %v246, 7
    %v248 = vsub.s32 0, %v247
    %v249 = vrot.slane %v244, %v248
    %v255 = vunpack.c.l.b16 %v240
    %v256 = vunpack.c.l.b16 %v241
    %v257 = vunpack.c.l.b16 %v242
    %v258 = vunpack.c.l.b16 %v243
    %v259 = vpack.c.b16 %v256, %v255
    %v260 = vpack.c.b16 %v258, %v257
    %v264 = vsel %vm83, %v239, 0
    %266 = vmatprep.subr.bf16.mxu0 0
    %267 = vmatpush1.bf16.msra.mxu0 %v259
    %268 = vmatprep.subr.bf16.mxu0 0
    %269 = vmatpush1.bf16.msra.mxu0 %v260
    %270 = vmatprep.subr.bf16.mxu0 0
    %271 = vmatpush1.bf16.msra.mxu0 0
    %272 = vmatprep.subr.bf16.mxu0 0
    %273 = vmatpush1.bf16.msra.mxu0 0
    %274 = vmatprep.subr.bf16.mxu0 0
    %275 = vmatpush1.bf16.msra.mxu0 0
    %276 = vmatprep.subr.bf16.mxu0 0
    %277 = vmatpush1.bf16.msra.mxu0 0
    %278 = vmatprep.subr.bf16.mxu0 0
    %279 = vmatpush1.bf16.msra.mxu0 0
    %280 = vmatprep.subr.bf16.mxu0 0
    %281 = vmatpush1.bf16.msra.mxu0 0
    %282 = vmatprep.subr.bf16.mxu0 0
    %283 = vmatpush1.bf16.msra.mxu0 0
    %284 = vmatprep.subr.bf16.mxu0 0
    %285 = vmatpush1.bf16.msra.mxu0 0
    %286 = vmatprep.subr.bf16.mxu0 0
    %287 = vmatpush1.bf16.msra.mxu0 0
    %288 = vmatprep.subr.bf16.mxu0 0
    %289 = vmatpush1.bf16.msra.mxu0 0
    %290 = vmatprep.subr.bf16.mxu0 0
    %291 = vmatpush1.bf16.msra.mxu0 0
    %292 = vmatprep.subr.bf16.mxu0 0
    %293 = vmatpush1.bf16.msra.mxu0 0
    %294 = vmatprep.subr.bf16.mxu0 0
    %295 = vmatpush1.bf16.msra.mxu0 0
    %296 = vmatprep.subr.bf16.mxu0 0
    %297 = vmatpush1.bf16.msra.mxu0 0
    %298 = vmatprep.mubr.bf16.mxu0 0
    %299 = vmatmul.mubr.bf16.gmra.mrb[0].mxu0 %v264
    %v300 = vpop.f32.mrb[0].mxu0
    %v301 = vadd.f32 %v249, %v300
    %v302 = vpop.f32.mrb[0].mxu0
    %v303 = vpop.f32.mrb[0].mxu0
    %v304 = vpop.f32.mrb[0].mxu0
    %305 = vdwg.mxu0
    %v306 = vxor.u32 %v301, 2147483648
    %v307 = vmul.f32 %v306, 1.442695
    %v308 = vpow.pop %v307
    %v309 = vadd.f32 %v308, 1.0
    %v310 = vrcp.pop %v309
    %v311 = vmul.f32 1.0, %v310
    %v312 = vld [vmem:[%s7] sm:$0x1]
    %v314 = vlaneseq
    %v315 = vshrl.u32 %v314, 7
    %v316 = vsub.s32 0, %v315
    %v317 = vrot.slane %v312, %v316
    %v319 = vmul.f32 %v311, %v317
    %321 = vrot.lane.b32.xlu0 %v319, 64
    %v322 = vpop.permute.xlu0 %321
    %v324 = vadd.f32 %v301, %v322
    %v325 = vtanh.pop %v324
    %v326 = vsub.f32 1.0, %v311
    %328 = vrot.lane.b32.xlu0 %v325, 96
    %v329 = vpop.permute.xlu0 %328
    %v331 = vmul.f32 %v326, %v329
    %v332 = vpack.c.bf16 %v331, %v331
    %v333 = vld [vmem:[%s8] sm:$0xf]
    %v334 = vld [vmem:[%s8 + $0x4] sm:$0xf]
    %v335 = vld [vmem:[%s8 + $0x8] sm:$0xf]
    %v336 = vld [vmem:[%s8 + $0xc] sm:$0xf]
    %v337 = vld [vmem:[%s9] sm:$0x1]
    %v339 = vlaneseq
    %v340 = vshrl.u32 %v339, 7
    %v341 = vsub.s32 0, %v340
    %v342 = vrot.slane %v337, %v341
    %345 = vrot.lane.b32.xlu0 %v332, 96
    %v346 = vpop.permute.xlu0 %345
    %v351 = vunpack.c.l.b16 %v333
    %v352 = vunpack.c.l.b16 %v334
    %v353 = vunpack.c.l.b16 %v335
    %v354 = vunpack.c.l.b16 %v336
    %v355 = vpack.c.b16 %v352, %v351
    %v356 = vpack.c.b16 %v354, %v353
    %v360 = vsel %vm83, %v346, 0
    %362 = vmatprep.subr.bf16.mxu0 0
    %363 = vmatpush1.bf16.msra.mxu0 %v355
    %364 = vmatprep.subr.bf16.mxu0 0
    %365 = vmatpush1.bf16.msra.mxu0 %v356
    %366 = vmatprep.subr.bf16.mxu0 0
    %367 = vmatpush1.bf16.msra.mxu0 0
    %368 = vmatprep.subr.bf16.mxu0 0
    %369 = vmatpush1.bf16.msra.mxu0 0
    %370 = vmatprep.subr.bf16.mxu0 0
    %371 = vmatpush1.bf16.msra.mxu0 0
    %372 = vmatprep.subr.bf16.mxu0 0
    %373 = vmatpush1.bf16.msra.mxu0 0
    %374 = vmatprep.subr.bf16.mxu0 0
    %375 = vmatpush1.bf16.msra.mxu0 0
    %376 = vmatprep.subr.bf16.mxu0 0
    %377 = vmatpush1.bf16.msra.mxu0 0
    %378 = vmatprep.subr.bf16.mxu0 0
    %379 = vmatpush1.bf16.msra.mxu0 0
    %380 = vmatprep.subr.bf16.mxu0 0
    %381 = vmatpush1.bf16.msra.mxu0 0
    %382 = vmatprep.subr.bf16.mxu0 0
    %383 = vmatpush1.bf16.msra.mxu0 0
    %384 = vmatprep.subr.bf16.mxu0 0
    %385 = vmatpush1.bf16.msra.mxu0 0
    %386 = vmatprep.subr.bf16.mxu0 0
    %387 = vmatpush1.bf16.msra.mxu0 0
    %388 = vmatprep.subr.bf16.mxu0 0
    %389 = vmatpush1.bf16.msra.mxu0 0
    %390 = vmatprep.subr.bf16.mxu0 0
    %391 = vmatpush1.bf16.msra.mxu0 0
    %392 = vmatprep.subr.bf16.mxu0 0
    %393 = vmatpush1.bf16.msra.mxu0 0
    %394 = vmatprep.mubr.bf16.mxu0 0
    %395 = vmatmul.mubr.bf16.gmra.mrb[0].mxu0 %v360
    %v396 = vpop.f32.mrb[0].mxu0
    %v397 = vadd.f32 %v342, %v396
    %v398 = vpop.f32.mrb[0].mxu0
    %v399 = vpop.f32.mrb[0].mxu0
    %v400 = vpop.f32.mrb[0].mxu0
    %401 = vdwg.mxu0
    %402 = vst [vmem:[#allocation2] sm:$0xff] %v397
    // Predicated region
    $region42: #{tpu_custom_call.1} parent=1 // pred_check
      _
    $region43: #{tpu_custom_call.1} parent=1 // pred_check_branch
      %404 = sbr.rel (0) target = $region45
    $region44: #{tpu_custom_call.1} parent=1 // pred_region
      %s406 = ssub.s32 128, 128
      %407 = vsyncadd [#allocation3], %s406
      %s409 = sshll.u32 [#allocation2], 4
      %s410 = int_to_ptr.vmem [resolvable:$true] %s409
      %412 = dma.vmem_to_hbm [thread:$0]  %s410, 128, %s10, [#allocation3]
    $region45: #{tpu_custom_call.1} parent=1 // pred_fallthru
      _
    // Predicated region
    $region46: #{tpu_custom_call.1} parent=1 // pred_check
      _
    $region47: #{tpu_custom_call.1} parent=1 // pred_check_branch
      %414 = sbr.rel (0) target = $region49
    $region48: #{tpu_custom_call.1} parent=1 // pred_region
      %415 = dma.done [#allocation3], 128
    $region49: #{tpu_custom_call.1} parent=1 // pred_fallthru
      _
    %416 = vsyncpa [#allocation3], 1

</llo_original>
